<compile_context>
chip_gen: v5e
topology: v5e:2x2
jax: 0.10.0
libtpu: 0.0.40
codegen_flags: <defaults>
</compile_context>

<pallas_src>
import jax
import jax.numpy as jnp
from jax.experimental import pallas as pl
from jax.experimental.pallas import tpu as pltpu


def _refine_kernel(anchor_ref, residual_ref, out_ref):
    # anchor_ref:   (1,  N)  -- N = K*S, already in the output dtype,
    #                           broadcast over the batch (sublane) axis.
    # residual_ref: (Bt, N)  -- native dtype; cast on the VPU (free, HBM-bound).
    # out_ref:      (Bt, N)
    out_ref[...] = residual_ref[...].astype(out_ref.dtype) + anchor_ref[...]


# Single-block (unpipelined) path only for truly tiny problems.
_SINGLE_BLOCK_BYTES_LIMIT = 512 * 1024
_MIN_TILED_B = 16  # below this, tiling (min tile = 8 rows) can't give 2 steps


def _default_batch_tile(N, itemsize):
    """Pick a batch tile so each residual tile is a few MiB, sized to VMEM."""
    try:
        vmem_bytes = pltpu.get_tpu_info().vmem_capacity_bytes
    except Exception:  # be conservative if the query is unavailable
        vmem_bytes = 64 << 20
    if vmem_bytes >= (100 << 20):
        # v5e / v6e: 128 MiB VMEM -> ~5 MiB residual tiles (tb ~ 8192 @ f32,N=160)
        target_tile_bytes = 8192 * 160 * 4
    else:
        # v7x: 64 MiB VMEM -> ~2.5 MiB residual tiles (tb ~ 4096 @ f32,N=160)
        target_tile_bytes = 4096 * 160 * 4
    tb = target_tile_bytes // max(1, N * itemsize)
    return max(8, (tb // 8) * 8)


def adaptive_anchor_forward(C_residual_BKS, C_anchor_KS, *, batch_tile=None):
    """Pallas implementation of AdaptiveAnchor.forward.

    C_pred_refine = stop_gradient(C_anchor) (broadcast over batch) + C_residual
    """
    B, K, S = C_residual_BKS.shape
    assert C_anchor_KS.shape == (K, S)
    N = K * S

    # detach() semantics from the PyTorch module.
    C_anchor_KS = jax.lax.stop_gradient(C_anchor_KS)

    # Match PyTorch type-promotion semantics; only the tiny (K*S) anchor is
    # cast in the wrapper — the residual stays in its native dtype in HBM and
    # is cast inside the kernel.
    out_dtype = jnp.result_type(C_residual_BKS.dtype, C_anchor_KS.dtype)
    res_2d = C_residual_BKS.reshape(B, N)
    anc_2d = C_anchor_KS.reshape(1, N).astype(out_dtype)

    out_itemsize = jnp.dtype(out_dtype).itemsize
    res_itemsize = jnp.dtype(res_2d.dtype).itemsize
    total_bytes = B * N * (res_itemsize + out_itemsize) + N * out_itemsize

    use_single_block = (
        B < _MIN_TILED_B
        or (batch_tile is None and total_bytes <= _SINGLE_BLOCK_BYTES_LIMIT)
    )

    if use_single_block:
        # --- Tiny problem: one block, no grid, everything resident in VMEM.
        # TODO(synk): at this size (n_ped ~ 6) a fused XLA add beats any
        # standalone kernel; keep this path only for API completeness.
        out_2d = pl.pallas_call(
            _refine_kernel,
            out_shape=jax.ShapeDtypeStruct((B, N), out_dtype),
            in_specs=[
                pl.BlockSpec(memory_space=pltpu.MemorySpace.VMEM),  # anchor
                pl.BlockSpec(memory_space=pltpu.MemorySpace.VMEM),  # residual
            ],
            out_specs=pl.BlockSpec(memory_space=pltpu.MemorySpace.VMEM),
        )(anc_2d, res_2d)
    else:
        # --- Tiled path: big lane-dense batch tiles, pipelined in/out DMAs,
        # "parallel" grid axis (megacore-shardable on v7x). -----------------
        if batch_tile is not None:
            tb = int(batch_tile)
        else:
            tb = _default_batch_tile(N, max(res_itemsize, out_itemsize))
        # Keep the tile sublane-divisible and no larger than the batch.
        tb = max(8, min(tb, B))
        tb = max(8, (tb // 8) * 8)
        nb = pl.cdiv(B, tb)
        # Ensure >= 2 grid steps so both v7x TensorCores get work.
        if nb < 2:
            tb = max(8, ((pl.cdiv(B, 2) + 7) // 8) * 8)
            nb = pl.cdiv(B, tb)

        # VMEM budget: residual-in + out, double-buffered, plus the anchor row.
        per_buf = tb * N * max(res_itemsize, out_itemsize)
        vmem_limit = int(4 * per_buf + 4 * N * out_itemsize + (2 << 20))

        out_2d = pl.pallas_call(
            _refine_kernel,
            out_shape=jax.ShapeDtypeStruct((B, N), out_dtype),
            grid=(nb,),
            in_specs=[
                # anchor: same (1, N) row every step -> fetched once, resident.
                pl.BlockSpec((1, N), lambda b: (0, 0)),
                # residual: one lane-dense batch tile per step.
                pl.BlockSpec((tb, N), lambda b: (b, 0)),
            ],
            out_specs=pl.BlockSpec((tb, N), lambda b: (b, 0)),
            compiler_params=pltpu.CompilerParams(
                dimension_semantics=("parallel",),
                vmem_limit_bytes=vmem_limit,
            ),
        )(anc_2d, res_2d)

    return out_2d.reshape(B, K, S)


if __name__ == "__main__":
    # Hyper-params implied by the module: k (truncated singular dims),
    # s (num anchor samples). Batch = number of pedestrians.
    K = 8        # hyper_params.k
    S = 20       # hyper_params.num_samples
    B = 6        # n_ped (tiny production case)

    key = jax.random.PRNGKey(0)
    k_res, k_anchor, k_res2, k_res3 = jax.random.split(key, 4)

    # C_anchor_KN is nn.Parameter(zeros((k, s))) at __init__ and later filled
    # by anchor_initialization (KMeans); initialize it in-script so the add
    # is non-trivial.
    C_anchor = jax.random.normal(k_anchor, (K, S), dtype=jnp.float32)
    C_residual = jax.random.normal(k_res, (B, K, S), dtype=jnp.float32)

    out = adaptive_anchor_forward(C_residual, C_anchor)
    out = jax.block_until_ready(out)
    ref = C_residual + C_anchor[None, :, :]
    assert out.shape == (B, K, S)
    assert out.dtype == jnp.float32
    assert jnp.allclose(out, ref, atol=1e-6), "mismatch vs reference (small)"

    # Tiled path with a non-divisible batch (exercises the padded last tile).
    B_mid = 70
    C_residual_mid = jax.random.normal(k_res2, (B_mid, K, S), dtype=jnp.float32)
    out_mid = adaptive_anchor_forward(C_residual_mid, C_anchor, batch_tile=64)
    out_mid = jax.block_until_ready(out_mid)
    ref_mid = C_residual_mid + C_anchor[None, :, :]
    assert jnp.allclose(out_mid, ref_mid, atol=1e-6), "mismatch vs reference (non-divisible)"

    # Larger batch via the default (auto-sized) tiled path.
    B_big = 4096
    C_residual_big = jax.random.normal(k_res3, (B_big, K, S), dtype=jnp.float32)
    out_big = adaptive_anchor_forward(C_residual_big, C_anchor)
    out_big = jax.block_until_ready(out_big)
    ref_big = C_residual_big + C_anchor[None, :, :]
    assert jnp.allclose(out_big, ref_big, atol=1e-6), "mismatch vs reference (tiled)"

    print("KERNEL_OK")
</pallas_src>

<mosaic_0001>
module attributes {stable_mosaic.version = 11 : i64} {
  func.func @_refine_kernel(%arg0: memref<1x160xf32, #tpu.memory_space<vmem>>, %arg1: memref<6x160xf32, #tpu.memory_space<vmem>>, %arg2: memref<6x160xf32, #tpu.memory_space<vmem>>) attributes {dimension_semantics = [], scalar_prefetch = 0 : i64, scratch_operands = 0 : i64, tpu.core_type = #tpu.core_type<tc>} {
    %c0 = arith.constant 0 : index
    %c0_0 = arith.constant 0 : index
    %0 = vector.load %arg1[%c0, %c0_0] : memref<6x160xf32, #tpu.memory_space<vmem>>, vector<6x160xf32>
    %c0_1 = arith.constant 0 : index
    %c0_2 = arith.constant 0 : index
    %1 = vector.load %arg0[%c0_1, %c0_2] : memref<1x160xf32, #tpu.memory_space<vmem>>, vector<1x160xf32>
    %2 = vector.broadcast %1 : vector<1x160xf32> to vector<6x160xf32>
    %3 = arith.addf %0, %2 : vector<6x160xf32>
    %c0_3 = arith.constant 0 : index
    %c0_4 = arith.constant 0 : index
    %4 = vector.load %arg2[%c0_3, %c0_4] : memref<6x160xf32, #tpu.memory_space<vmem>>, vector<6x160xf32>
    tpu.vector_store %arg2[%c0_3, %c0_4], %3 {strides = array<i32>} : memref<6x160xf32, #tpu.memory_space<vmem>>, vector<6x160xf32>,
    return
  }
}

</mosaic_0001>

<llo_original>
// kernel: tpu_custom_call.1
$region0: #{tpu_custom_call.1}
  #allocation0 [shape = 'u32[]', space=smem, size = 0x4, offset = 0x4, fixed_abs, tag = 'smem constant byte address 0x4 - core index']
  #allocation1 [shape = 'u32[72,128]{1,0:T(1,128)}', space=vmem, size = 0x9000, scoped, tag = 'internal scratch']
  %s0 = inlined_call_operand.hbm [shape: f32[1,160], index: 0, kind: input, shape index: {}]
  %s1 = inlined_call_operand.hbm [shape: f32[6,160], index: 1, kind: input, shape index: {}]
  %s2 = inlined_call_operand.hbm [shape: f32[6,160], index: 2, kind: output, shape index: {}]
  %s3 = sld [smem:[#allocation0]]
  $region26: #{tpu_custom_call.1} parent=0
    _
  %s5 = ssub.s32 1, %s3
  %s6 = scalar_select 0, %s5, %s3
  $region1: #{tpu_custom_call.1} parent=0
    #allocation2 [shape = 'u8[1024]{0}', space=vmem, size = 0x400, scoped, tag = 'input window, operand 0, single buffered']
    #allocation3 [shape = 's32[1]{0}', space=sflag, size = 0x4, scoped, tag = 'scoped memory for tpu_custom_call.1']
    #allocation4 [shape = 's32[1]{0}', space=sflag, size = 0x4, scoped, tag = 'scoped memory for tpu_custom_call.1']
    #allocation5 [shape = 'u8[8192]{0}', space=vmem, size = 0x2000, scoped, tag = 'input window, operand 1, single buffered']
    #allocation6 [shape = 's32[1]{0}', space=sflag, size = 0x4, scoped, tag = 'scoped memory for tpu_custom_call.1']
    #allocation7 [shape = 'u8[8192]{0}', space=vmem, size = 0x2000, scoped, tag = 'output window, operand 0, single buffered']
    %7 = vsyncpa [#allocation3], 0
    %8 = vsyncpa [#allocation6], 0
    %9 = vsyncpa [#allocation4], 0
    // Predicated region
    $region2: #{tpu_custom_call.1} parent=1 // pred_check
      _
    $region3: #{tpu_custom_call.1} parent=1 // pred_check_branch
      %11 = sbr.rel (0) target = $region5
    $region4: #{tpu_custom_call.1} parent=1 // pred_region
      %13 = vsyncadd [#allocation3], 0
      %s15 = sshll.u32 %s0, 4
      %s16 = int_to_ptr.hbm [resolvable:$true] %s15
      %s17 = sshll.u32 [#allocation2], 4
      %s18 = int_to_ptr.vmem [resolvable:$true] %s17
      %20 = dma.hbm_to_vmem [thread:$0]  %s16, 32, %s18, [#allocation3]
    $region5: #{tpu_custom_call.1} parent=1 // pred_fallthru
      _
    // Predicated region
    $region6: #{tpu_custom_call.1} parent=1 // pred_check
      _
    $region7: #{tpu_custom_call.1} parent=1 // pred_check_branch
      %22 = sbr.rel (0) target = $region9
    $region8: #{tpu_custom_call.1} parent=1 // pred_region
      %24 = vsyncadd [#allocation6], 0
      %s26 = sshll.u32 %s1, 4
      %s27 = int_to_ptr.hbm [resolvable:$true] %s26
      %s28 = sshll.u32 [#allocation5], 4
      %s29 = int_to_ptr.vmem [resolvable:$true] %s28
      %31 = dma.hbm_to_vmem [thread:$0]  %s27, 256, %s29, [#allocation6]
    $region9: #{tpu_custom_call.1} parent=1 // pred_fallthru
      _
    // Predicated region
    $region10: #{tpu_custom_call.1} parent=1 // pred_check
      _
    $region11: #{tpu_custom_call.1} parent=1 // pred_check_branch
      %33 = sbr.rel (0) target = $region13
    $region12: #{tpu_custom_call.1} parent=1 // pred_region
      %35 = dma.done [#allocation3], 32
    $region13: #{tpu_custom_call.1} parent=1 // pred_fallthru
      _
    // Predicated region
    $region14: #{tpu_custom_call.1} parent=1 // pred_check
      _
    $region15: #{tpu_custom_call.1} parent=1 // pred_check_branch
      %37 = sbr.rel (0) target = $region17
    $region16: #{tpu_custom_call.1} parent=1 // pred_region
      %39 = dma.done [#allocation6], 256
    $region17: #{tpu_custom_call.1} parent=1 // pred_fallthru
      _
    %v40 = vld [vmem:[#allocation5] sm:$0x3f]
    %v41 = vld [vmem:[#allocation5 + $0x8] sm:$0x3f]
    %v42 = vld [vmem:[#allocation2] sm:$0x3]
    %v44 = vperm.slane %v42, 0
    %v45 = vperm.slane %v42, 1
    %v48 = vadd.f32 %v40, %v44
    %v49 = vadd.f32 %v41, %v45
    %50 = vst [vmem:[#allocation7] sm:$0x3f] %v48
    %vm51 = vcmask 259072
    %52 = vst.msk [vmem:[#allocation7 + $0x8] sm:$0x3f] %vm51, %v49
    // Predicated region
    $region18: #{tpu_custom_call.1} parent=1 // pred_check
      _
    $region19: #{tpu_custom_call.1} parent=1 // pred_check_branch
      %54 = sbr.rel (0) target = $region21
    $region20: #{tpu_custom_call.1} parent=1 // pred_region
      %56 = vsyncadd [#allocation4], 0
      %s58 = sshll.u32 [#allocation7], 4
      %s59 = int_to_ptr.vmem [resolvable:$true] %s58
      %s60 = sshll.u32 %s2, 4
      %s61 = int_to_ptr.hbm [resolvable:$true] %s60
      %63 = dma.vmem_to_hbm [thread:$0]  %s59, 256, %s61, [#allocation4]
    $region21: #{tpu_custom_call.1} parent=1 // pred_fallthru
      _
    // Predicated region
    $region22: #{tpu_custom_call.1} parent=1 // pred_check
      _
    $region23: #{tpu_custom_call.1} parent=1 // pred_check_branch
      %65 = sbr.rel (0) target = $region25
    $region24: #{tpu_custom_call.1} parent=1 // pred_region
      %67 = dma.done [#allocation4], 256
    $region25: #{tpu_custom_call.1} parent=1 // pred_fallthru
      _
    %68 = vsyncpa [#allocation3], 1
    %69 = vsyncpa [#allocation6], 1
    %70 = vsyncpa [#allocation4], 1

</llo_original>
